<compile_context>
chip_gen: v5e
topology: v5e:2x2
jax: 0.10.0
libtpu: 0.0.40
codegen_flags: <defaults>
</compile_context>

<pallas_src>
import functools

import jax
import jax.numpy as jnp
from jax.experimental import pallas as pl
from jax.experimental.pallas import tpu as pltpu


def _round_up(x, m):
    return ((x + m - 1) // m) * m


def _wce_kernel(x_ref, t_ref, w_ref, wnll_ref, wsum_ref):
    """One row tile: per-row weighted NLL and per-row target weight."""
    x = x_ref[...].astype(jnp.float32)          # (TN, C) logits (widen here)
    t = t_ref[...]                              # (TN, 1) int32 targets
    w = w_ref[...].astype(jnp.float32)          # (1,  C) class weights

    # One-hot selection of the target class per row (bool mask).
    cls = jax.lax.broadcasted_iota(jnp.int32, x.shape, 1)   # (TN, C)
    onehot = cls == t                                       # (TN, C)

    # Numerically-stable log-sum-exp along the class (lane) axis.
    m = jnp.max(x, axis=-1, keepdims=True)                  # (TN, 1)
    lse = m + jnp.log(jnp.sum(jnp.exp(x - m), axis=-1, keepdims=True))

    # where-based selection avoids 0 * (-inf) NaNs for masked logits.
    x_t = jnp.sum(jnp.where(onehot, x, 0.0), axis=-1, keepdims=True)   # x[i, y_i]
    w_t = jnp.sum(jnp.where(onehot, w, 0.0), axis=-1, keepdims=True)   # w[y_i]

    wnll_ref[...] = w_t * (lse - x_t)           # (TN, 1) weighted NLL per row
    wsum_ref[...] = w_t                         # (TN, 1) weight per row


@functools.partial(jax.jit, static_argnames=("row_tile",))
def weighted_cross_entropy(output, target, loss_weight, *, row_tile=256):
    """output: (N, C) float logits; target: (N,) int; loss_weight: (C,) f32."""
    n, c = output.shape
    itemsize = jnp.dtype(output.dtype).itemsize
    lane_c = _round_up(c, 128)                  # VMEM lane padding of the block

    # Effective row tile: as large as useful, multiple of 8, and small enough
    # that the double-buffered logits block fits comfortably in the default
    # 32 MiB scoped VMEM on every TPU generation (incl. v7x).
    rt = _round_up(min(row_tile, max(n, 1)), 8)
    while rt > 8 and 2 * rt * lane_c * itemsize > 16 * 1024 * 1024:
        rt = max(8, _round_up(rt // 2, 8))

    n_pad = _round_up(n, rt)
    pad_rows = n_pad - n

    x = output
    t = target.astype(jnp.int32).reshape(n, 1)
    if pad_rows:
        x = jnp.pad(x, ((0, pad_rows), (0, 0)))
        t = jnp.pad(t, ((0, pad_rows), (0, 0)), constant_values=-1)
    w2d = loss_weight.astype(jnp.float32).reshape(1, c)

    grid = (n_pad // rt,)

    wnll, wsum = pl.pallas_call(
        _wce_kernel,
        out_shape=(
            jax.ShapeDtypeStruct((n_pad, 1), jnp.float32),
            jax.ShapeDtypeStruct((n_pad, 1), jnp.float32),
        ),
        grid_spec=pltpu.PrefetchScalarGridSpec(
            num_scalar_prefetch=0,
            grid=grid,
            in_specs=[
                pl.BlockSpec((rt, c), lambda i: (i, 0)),    # logits tile
                pl.BlockSpec((rt, 1), lambda i: (i, 0)),    # target tile
                pl.BlockSpec((1, c), lambda i: (0, 0)),     # class weights (fetched once)
            ],
            out_specs=[
                pl.BlockSpec((rt, 1), lambda i: (i, 0)),    # per-row w*nll
                pl.BlockSpec((rt, 1), lambda i: (i, 0)),    # per-row w
            ],
        ),
        compiler_params=pltpu.CompilerParams(
            dimension_semantics=("parallel",),   # no loop-carried state -> megacore OK
        ),
    )(x, t, w2d)

    # Tiny final reduction in plain JAX (drops padded rows).
    num = jnp.sum(wnll[:n, 0])
    den = jnp.sum(wsum[:n, 0])
    return num / den


def _reference(output, target, loss_weight):
    """Pure-JAX reference mirroring torch.nn.functional.cross_entropy."""
    x = output.astype(jnp.float32)
    lse = jax.scipy.special.logsumexp(x, axis=-1)
    x_t = jnp.take_along_axis(x, target[:, None], axis=-1)[:, 0]
    w_t = loss_weight[target]
    return jnp.sum(w_t * (lse - x_t)) / jnp.sum(w_t)


if __name__ == "__main__":
    # Deterministic setup (synthetic; module __init__ takes sample_per_class).
    C = 10
    sample_per_class = jnp.array(
        [200.0, 150.0, 120.0, 90.0, 70.0, 50.0, 30.0, 20.0, 12.0, 8.0],
        dtype=jnp.float32,
    )
    # w_y = n / (k * n_y)
    loss_weight = sample_per_class.sum() / (C * sample_per_class)

    key = jax.random.PRNGKey(0)

    # --- small exact case (single tile) -------------------------------------
    N = 16
    k1, k2, k3, k4 = jax.random.split(key, 4)
    logits = jax.random.normal(k1, (N, C), dtype=jnp.float32)
    target = jax.random.randint(k2, (N,), 0, C, dtype=jnp.int32)

    loss = weighted_cross_entropy(logits, target, loss_weight)
    loss = jax.block_until_ready(loss)
    ref = _reference(logits, target, loss_weight)
    assert jnp.allclose(loss, ref, rtol=1e-5, atol=1e-5), (loss, ref)

    # --- larger, non-tile-multiple, bf16 case (multi-tile, padding path) ----
    N2 = 1000
    logits2 = jax.random.normal(k3, (N2, C), dtype=jnp.float32).astype(jnp.bfloat16)
    target2 = jax.random.randint(k4, (N2,), 0, C, dtype=jnp.int32)

    loss2 = weighted_cross_entropy(logits2, target2, loss_weight, row_tile=256)
    loss2 = jax.block_until_ready(loss2)
    ref2 = _reference(logits2.astype(jnp.float32), target2, loss_weight)
    assert jnp.allclose(loss2, ref2, rtol=1e-3, atol=1e-3), (loss2, ref2)

    print("KERNEL_OK")
</pallas_src>

<mosaic_0001>
module attributes {stable_mosaic.version = 11 : i64} {
  func.func @_wce_kernel(%arg0: i32, %arg1: memref<16x10xf32, #tpu.memory_space<vmem>>, %arg2: memref<16x1xi32, #tpu.memory_space<vmem>>, %arg3: memref<1x10xf32, #tpu.memory_space<vmem>>, %arg4: memref<16x1xf32, #tpu.memory_space<vmem>>, %arg5: memref<16x1xf32, #tpu.memory_space<vmem>>) attributes {dimension_semantics = [#tpu.dimension_semantics<parallel>], iteration_bounds = array<i64: 1>, scalar_prefetch = 0 : i64, scratch_operands = 0 : i64, tpu.core_type = #tpu.core_type<tc>, window_params = [{transform_indices = @transform_0, window_bounds = array<i64: 16, 10>}, {transform_indices = @transform_1, window_bounds = array<i64: 16, 1>}, {pipeline_mode = #tpu.pipeline_mode<synchronous>, transform_indices = @transform_2, window_bounds = array<i64: 1, 10>}, {transform_indices = @transform_3, window_bounds = array<i64: 16, 1>}, {transform_indices = @transform_4, window_bounds = array<i64: 16, 1>}]} {
    %c0 = arith.constant 0 : index
    %c0_0 = arith.constant 0 : index
    %0 = vector.load %arg1[%c0, %c0_0] : memref<16x10xf32, #tpu.memory_space<vmem>>, vector<16x10xf32>
    %c0_1 = arith.constant 0 : index
    %c0_2 = arith.constant 0 : index
    %1 = vector.load %arg2[%c0_1, %c0_2] : memref<16x1xi32, #tpu.memory_space<vmem>>, vector<16x1xi32>
    %c0_3 = arith.constant 0 : index
    %c0_4 = arith.constant 0 : index
    %2 = vector.load %arg3[%c0_3, %c0_4] : memref<1x10xf32, #tpu.memory_space<vmem>>, vector<1x10xf32>
    %3 = tpu.iota {dimensions = array<i32: 1>} : vector<16x10xi32>
    %4 = vector.broadcast %1 : vector<16x1xi32> to vector<16x10xi32>
    %5 = arith.cmpi eq, %3, %4 : vector<16x10xi32>
    %cst = arith.constant dense<0xFF800000> : vector<16xf32>
    %6 = vector.multi_reduction <maximumf>, %0, %cst [1] : vector<16x10xf32> to vector<16xf32>
    %7 = vector.shape_cast %6 : vector<16xf32> to vector<16x1xf32>
    %8 = vector.broadcast %7 : vector<16x1xf32> to vector<16x10xf32>
    %9 = arith.subf %0, %8 : vector<16x10xf32>
    %10 = math.exp %9 : vector<16x10xf32>
    %cst_5 = arith.constant dense<0.000000e+00> : vector<16xf32>
    %11 = vector.multi_reduction <add>, %10, %cst_5 [1] : vector<16x10xf32> to vector<16xf32>
    %12 = vector.shape_cast %11 : vector<16xf32> to vector<16x1xf32>
    %13 = math.log %12 : vector<16x1xf32>
    %14 = arith.addf %7, %13 : vector<16x1xf32>
    %cst_6 = arith.constant 0.000000e+00 : f32
    %15 = vector.broadcast %cst_6 : f32 to vector<16x10xf32>
    %16 = arith.select %5, %0, %15 : vector<16x10xi1>, vector<16x10xf32>
    %cst_7 = arith.constant dense<0.000000e+00> : vector<16xf32>
    %17 = vector.multi_reduction <add>, %16, %cst_7 [1] : vector<16x10xf32> to vector<16xf32>
    %18 = vector.shape_cast %17 : vector<16xf32> to vector<16x1xf32>
    %cst_8 = arith.constant 0.000000e+00 : f32
    %19 = vector.shape_cast %2 : vector<1x10xf32> to vector<1x10xf32>
    %20 = vector.broadcast %19 : vector<1x10xf32> to vector<16x10xf32>
    %21 = vector.broadcast %cst_8 : f32 to vector<16x10xf32>
    %22 = arith.select %5, %20, %21 : vector<16x10xi1>, vector<16x10xf32>
    %cst_9 = arith.constant dense<0.000000e+00> : vector<16xf32>
    %23 = vector.multi_reduction <add>, %22, %cst_9 [1] : vector<16x10xf32> to vector<16xf32>
    %24 = vector.shape_cast %23 : vector<16xf32> to vector<16x1xf32>
    %25 = arith.subf %14, %18 : vector<16x1xf32>
    %26 = arith.mulf %24, %25 : vector<16x1xf32>
    %c0_10 = arith.constant 0 : index
    %c0_11 = arith.constant 0 : index
    %27 = vector.load %arg4[%c0_10, %c0_11] : memref<16x1xf32, #tpu.memory_space<vmem>>, vector<16x1xf32>
    tpu.vector_store %arg4[%c0_10, %c0_11], %26 {strides = array<i32>} : memref<16x1xf32, #tpu.memory_space<vmem>>, vector<16x1xf32>,
    %c0_12 = arith.constant 0 : index
    %c0_13 = arith.constant 0 : index
    %28 = vector.load %arg5[%c0_12, %c0_13] : memref<16x1xf32, #tpu.memory_space<vmem>>, vector<16x1xf32>
    tpu.vector_store %arg5[%c0_12, %c0_13], %24 {strides = array<i32>} : memref<16x1xf32, #tpu.memory_space<vmem>>, vector<16x1xf32>,
    return
  }
  func.func @transform_0(%arg0: i32) -> (i32, i32) {
    %c0_i32 = arith.constant 0 : i32
    %c0_i32_0 = arith.constant 0 : i32
    return %arg0, %c0_i32 : i32, i32
  }
  func.func @transform_1(%arg0: i32) -> (i32, i32) {
    %c0_i32 = arith.constant 0 : i32
    %c0_i32_0 = arith.constant 0 : i32
    return %arg0, %c0_i32 : i32, i32
  }
  func.func @transform_2(%arg0: i32) -> (i32, i32) {
    %c0_i32 = arith.constant 0 : i32
    %c0_i32_0 = arith.constant 0 : i32
    %c0_i32_1 = arith.constant 0 : i32
    return %c0_i32, %c0_i32_0 : i32, i32
  }
  func.func @transform_3(%arg0: i32) -> (i32, i32) {
    %c0_i32 = arith.constant 0 : i32
    %c0_i32_0 = arith.constant 0 : i32
    return %arg0, %c0_i32 : i32, i32
  }
  func.func @transform_4(%arg0: i32) -> (i32, i32) {
    %c0_i32 = arith.constant 0 : i32
    %c0_i32_0 = arith.constant 0 : i32
    return %arg0, %c0_i32 : i32, i32
  }
}

</mosaic_0001>

<llo_original>
// kernel: weighted_cross_entropy.1
$region0: #{weighted_cross_entropy.1}
  #allocation0 [shape = 'u32[]', space=smem, size = 0x4, offset = 0x4, fixed_abs, tag = 'smem constant byte address 0x4 - core index']
  #allocation1 [shape = 'u32[72,128]{1,0:T(1,128)}', space=vmem, size = 0x9000, scoped, tag = 'internal scratch']
  %s0 = inlined_call_operand.vmem [shape: f32[16,10], index: 0, kind: input, shape index: {}]
  %s1 = inlined_call_operand.vmem [shape: s32[16,1], index: 1, kind: input, shape index: {}]
  %s2 = inlined_call_operand.vmem [shape: f32[1,10], index: 2, kind: input, shape index: {}]
  %s3 = inlined_call_operand.vmem [shape: f32[16,1], index: 3, kind: output, shape index: {0}]
  %s4 = inlined_call_operand.vmem [shape: f32[16,1], index: 4, kind: output, shape index: {1}]
  %5 = xla_tuple %s3, %s4
  %s6 = sld [smem:[#allocation0]]
  $region30: #{weighted_cross_entropy.1} parent=0
    _
  %s8 = ssub.s32 1, %s6
  %s9 = scalar_select 0, %s8, %s6
  // Predicated region
  $region2: #{weighted_cross_entropy.1} parent=0 // pred_check
    _
  $region3: #{weighted_cross_entropy.1} parent=0 // pred_check_branch
    %11 = sbr.rel (0) target = $region5
  $region4: #{weighted_cross_entropy.1} parent=0 // pred_region
    _
  $region5: #{weighted_cross_entropy.1} parent=0 // pred_fallthru
    _
  // Predicated region
  $region6: #{weighted_cross_entropy.1} parent=0 // pred_check
    _
  $region7: #{weighted_cross_entropy.1} parent=0 // pred_check_branch
    %13 = sbr.rel (0) target = $region9
  $region8: #{weighted_cross_entropy.1} parent=0 // pred_region
    _
  $region9: #{weighted_cross_entropy.1} parent=0 // pred_fallthru
    _
  // Predicated region
  $region10: #{weighted_cross_entropy.1} parent=0 // pred_check
    _
  $region11: #{weighted_cross_entropy.1} parent=0 // pred_check_branch
    %15 = sbr.rel (0) target = $region13
  $region12: #{weighted_cross_entropy.1} parent=0 // pred_region
    _
  $region13: #{weighted_cross_entropy.1} parent=0 // pred_fallthru
    _
  %v16 = vld [vmem:[%s0] sm:$0xff]
  %v17 = vld [vmem:[%s0 + $0x8] sm:$0xff]
  %v18 = vld [vmem:[%s1] sm:$0xff]
  %v19 = vld [vmem:[%s1 + $0x8] sm:$0xff]
  %v20 = vld [vmem:[%s2] sm:$0x1]
  %v21 = vlaneseq
  %v22 = vand.u32 %v21, 127
  %23 = vset.pattern.permute.xlu0 0
  %24 = vperm.xlu0 %23, %v18
  %v25 = vpop.permute.xlu0 %24
  %26 = vset.pattern.permute.xlu0 0
  %27 = vperm.xlu0 %26, %v19
  %v28 = vpop.permute.xlu0 %27
  %vm29 = vcmp.eq.s32.totalorder %v22, %v25
  %vm30 = vcmp.eq.s32.totalorder %v22, %v28
  %vm31 = vcmask 80896
  %v32 = vsel %vm31, %v16, -inf
  %33 = vmax.xlane.f32.xlu0 %v32
  %v34 = vpop.xlane.xlu0 %33
  %v35 = vsel %vm31, %v17, -inf
  %36 = vmax.xlane.f32.xlu0 %v35
  %v37 = vpop.xlane.xlu0 %36
  %v38 = vsub.f32 %v16, %v34
  %v39 = vsub.f32 %v17, %v37
  %v40 = vmul.f32 %v38, 1.442695
  %v41 = vpow.pop %v40
  %v42 = vmul.f32 %v39, 1.442695
  %v43 = vpow.pop %v42
  %v44 = vsel %vm31, %v41, 0.0
  %45 = vadd.xlane.f32.xlu0 %v44
  %v46 = vpop.xlane.xlu0 %45
  %v47 = vsel %vm31, %v43, 0.0
  %48 = vadd.xlane.f32.xlu0 %v47
  %v49 = vpop.xlane.xlu0 %48
  %v50 = vlog2.pop %v46
  %v51 = vmul.f32 %v50, 0.6931472
  %v52 = vlog2.pop %v49
  %v53 = vmul.f32 %v52, 0.6931472
  %v54 = vadd.f32 %v34, %v51
  %v55 = vadd.f32 %v37, %v53
  %v56 = vsel %vm29, %v16, 0.0
  %v57 = vsel %vm30, %v17, 0.0
  %v58 = vsel %vm31, %v56, 0.0
  %59 = vadd.xlane.f32.xlu0 %v58
  %v60 = vpop.xlane.xlu0 %59
  %v61 = vsel %vm31, %v57, 0.0
  %62 = vadd.xlane.f32.xlu0 %v61
  %v63 = vpop.xlane.xlu0 %62
  %v65 = vperm.slane %v20, 0
  %v67 = vsel %vm29, %v65, 0.0
  %v68 = vsel %vm30, %v65, 0.0
  %v69 = vsel %vm31, %v67, 0.0
  %70 = vadd.xlane.f32.xlu0 %v69
  %v71 = vpop.xlane.xlu0 %70
  %v72 = vsel %vm31, %v68, 0.0
  %73 = vadd.xlane.f32.xlu0 %v72
  %v74 = vpop.xlane.xlu0 %73
  %v75 = vsub.f32 %v54, %v60
  %v76 = vsub.f32 %v55, %v63
  %v77 = vmul.f32 %v71, %v75
  %v78 = vmul.f32 %v74, %v76
  %vm79 = vcmask 7168
  %80 = vst.msk [vmem:[%s3] sm:$0xff] %vm79, %v77
  %81 = vst.msk [vmem:[%s3 + $0x8] sm:$0xff] %vm79, %v78
  %82 = vst.msk [vmem:[%s4] sm:$0xff] %vm79, %v71
  %83 = vst.msk [vmem:[%s4 + $0x8] sm:$0xff] %vm79, %v74
  // Predicated region
  $region14: #{weighted_cross_entropy.1} parent=0 // pred_check
    _
  $region15: #{weighted_cross_entropy.1} parent=0 // pred_check_branch
    %85 = sbr.rel (0) target = $region17
  $region16: #{weighted_cross_entropy.1} parent=0 // pred_region
    _
  $region17: #{weighted_cross_entropy.1} parent=0 // pred_fallthru
    _
  // Predicated region
  $region18: #{weighted_cross_entropy.1} parent=0 // pred_check
    _
  $region19: #{weighted_cross_entropy.1} parent=0 // pred_check_branch
    %87 = sbr.rel (0) target = $region21
  $region20: #{weighted_cross_entropy.1} parent=0 // pred_region
    _
  $region21: #{weighted_cross_entropy.1} parent=0 // pred_fallthru
    _
  // Predicated region
  $region22: #{weighted_cross_entropy.1} parent=0 // pred_check
    _
  $region23: #{weighted_cross_entropy.1} parent=0 // pred_check_branch
    %89 = sbr.rel (0) target = $region25
  $region24: #{weighted_cross_entropy.1} parent=0 // pred_region
    _
  $region25: #{weighted_cross_entropy.1} parent=0 // pred_fallthru
    _
  // Predicated region
  $region26: #{weighted_cross_entropy.1} parent=0 // pred_check
    _
  $region27: #{weighted_cross_entropy.1} parent=0 // pred_check_branch
    %91 = sbr.rel (0) target = $region29
  $region28: #{weighted_cross_entropy.1} parent=0 // pred_region
    _
  $region29: #{weighted_cross_entropy.1} parent=0 // pred_fallthru
    _

</llo_original>
